<compile_context>
chip_gen: v7x
topology: tpu7x:2x2x1
jax: 0.10.0
libtpu: 0.0.40
codegen_flags: <defaults>
</compile_context>

<pallas_src>
import jax
import jax.numpy as jnp
from jax.experimental import pallas as pl
from jax.experimental.pallas import tpu as pltpu


def _traj_recon_kernel(x_ref,      # (TB, D)    f32 (cast to compute dtype in-kernel)
                       w1_ref,     # (D, Hp)    compute dtype
                       b1_ref,     # (1, Hp)    f32
                       we_ref,     # (Hp, D)    compute dtype (pre-composed)
                       be_ref,     # (1, D)     f32 (pre-composed)
                       o_ref):     # (TB, D)    out dtype
    # In-kernel cast of the activations (VPU work hidden under DMA/MXU);
    # keeps the HBM read at f32 width only once.
    x = x_ref[...].astype(w1_ref.dtype)

    # encoder mlp1 + leaky_relu (slope 0.01), f32 accumulation + f32 elementwise
    h = jnp.dot(x, w1_ref[...], preferred_element_type=jnp.float32) + b1_ref[...]
    h = jnp.where(h >= 0, h, 0.01 * h)

    # composed (enc.mlp3 @ dec.mlp1 @ dec.mlp3)
    out = jnp.dot(h.astype(we_ref.dtype), we_ref[...],
                  preferred_element_type=jnp.float32) + be_ref[...]

    o_ref[...] = out.astype(o_ref.dtype)


def _pick_batch_tile(B, block_rows):
    """Pick a sublane-aligned batch tile; prefer >=2 grid steps (megacore)."""
    if B <= block_rows:
        # Split the batch into two tiles when possible so both v7x TensorCores
        # get work; each tile must be a multiple of 8 sublanes (or the full B).
        half = 8 * pl.cdiv(pl.cdiv(B, 2), 8)
        if half < B:
            return half, pl.cdiv(B, half)
        return B, 1
    tb = max(8, (block_rows // 8) * 8)
    return tb, pl.cdiv(B, tb)


def traj_recon_forward(traj, params, *, block_rows=2048,
                       compute_dtype=jnp.bfloat16, out_dtype=jnp.float32):
    """traj: (B, num_steps, wpt_dim) f32 -> recon_traj same shape (out_dtype)."""
    B, S, W = traj.shape
    D = S * W
    x = traj.reshape(B, D)                       # f32; no wrapper-side cast

    (w1, b1, w2, b2, w3, b3, w4, b4) = params
    H = w1.shape[1]

    # --- trace-time pre-composition of the three back-to-back linears ---
    w_eff = w2 @ w3 @ w4                         # (H, D)
    b_eff = (b2 @ w3 + b3) @ w4 + b4             # (1, D)

    # --- pad hidden dim to a lane-dense multiple of 128 (zero padding) ---
    Hp = 128 * pl.cdiv(H, 128)
    if Hp != H:
        w1 = jnp.pad(w1, ((0, 0), (0, Hp - H)))
        b1 = jnp.pad(b1, ((0, 0), (0, Hp - H)))
        w_eff = jnp.pad(w_eff, ((0, Hp - H), (0, 0)))

    # --- dtype plumbing: matmul weights in compute_dtype, biases in f32 ---
    w1_c = w1.astype(compute_dtype)
    we_c = w_eff.astype(compute_dtype)
    b1_f = b1.astype(jnp.float32)
    be_f = b_eff.astype(jnp.float32)

    TB, n_blocks = _pick_batch_tile(B, block_rows)

    cost = pl.CostEstimate(
        flops=2 * B * (D * Hp + Hp * D),
        transcendentals=0,
        bytes_accessed=(B * D * 4                                   # x (f32 in)
                        + B * D * jnp.dtype(out_dtype).itemsize     # out
                        + w1_c.size * jnp.dtype(compute_dtype).itemsize
                        + we_c.size * jnp.dtype(compute_dtype).itemsize
                        + b1_f.size * 4 + be_f.size * 4),
    )

    out = pl.pallas_call(
        _traj_recon_kernel,
        out_shape=jax.ShapeDtypeStruct((B, D), out_dtype),
        grid=(n_blocks,),
        in_specs=[
            pl.BlockSpec((TB, D), lambda i: (i, 0)),    # x: tiled over batch
            pl.BlockSpec((D, Hp), lambda i: (0, 0)),    # w1: VMEM-resident
            pl.BlockSpec((1, Hp), lambda i: (0, 0)),    # b1
            pl.BlockSpec((Hp, D), lambda i: (0, 0)),    # w_eff
            pl.BlockSpec((1, D), lambda i: (0, 0)),     # b_eff
        ],
        out_specs=pl.BlockSpec((TB, D), lambda i: (i, 0)),
        compiler_params=pltpu.CompilerParams(
            dimension_semantics=("parallel",)),
        cost_estimate=cost,
    )(x, w1_c, b1_f, we_c, be_f)

    return out.reshape(B, S, W)


def init_params(key, num_steps, wpt_dim, hidden_dim, z_feat_dim):
    """Init mimicking nn.Linear's uniform(-1/sqrt(fan_in), 1/sqrt(fan_in)).

    Weights stored transposed as (in_dim, out_dim); biases as (1, out_dim).
    """
    D = num_steps * wpt_dim

    def linear(k, fan_in, fan_out):
        kw, kb = jax.random.split(k)
        bound = 1.0 / jnp.sqrt(jnp.float32(fan_in))
        w = jax.random.uniform(kw, (fan_in, fan_out), jnp.float32, -bound, bound)
        b = jax.random.uniform(kb, (1, fan_out), jnp.float32, -bound, bound)
        return w, b

    k1, k2, k3, k4 = jax.random.split(key, 4)
    w1, b1 = linear(k1, D, hidden_dim)           # ALLEncoder.mlp1
    w2, b2 = linear(k2, hidden_dim, z_feat_dim)  # ALLEncoder.mlp3
    w3, b3 = linear(k3, z_feat_dim, hidden_dim)  # AllDecoder.mlp1
    w4, b4 = linear(k4, hidden_dim, D)           # AllDecoder.mlp3
    return (w1, b1, w2, b2, w3, b3, w4, b4)


def _reference_forward(traj, params):
    """Pure-JAX f32 reference (matches PyTorch forward semantics)."""
    (w1, b1, w2, b2, w3, b3, w4, b4) = params
    B, S, W = traj.shape
    x = traj.reshape(B, S * W)
    h = x @ w1 + b1
    h = jnp.where(h >= 0, h, 0.01 * h)
    z = h @ w2 + b2
    d = z @ w3 + b3
    out = d @ w4 + b4
    return out.reshape(B, S, W)


if __name__ == "__main__":
    key = jax.random.PRNGKey(0)

    # --- test 1: tiny shapes, f32 compute path, tight tolerance ---
    batch, num_steps, wpt_dim, hidden_dim, z_feat_dim = 2, 8, 6, 32, 32
    k_traj, k_params, key = jax.random.split(key, 3)
    traj = jax.random.normal(k_traj, (batch, num_steps, wpt_dim), jnp.float32)
    params = init_params(k_params, num_steps, wpt_dim, hidden_dim, z_feat_dim)

    recon = traj_recon_forward(traj, params, compute_dtype=jnp.float32)
    recon = jax.block_until_ready(recon)
    ref = _reference_forward(traj, params)
    assert recon.shape == (batch, num_steps, wpt_dim)
    assert jnp.allclose(recon, ref, atol=1e-4, rtol=1e-4)

    # --- test 2: module-like dims, multi-tile grid, bf16 matmul path ---
    batch, num_steps, wpt_dim, hidden_dim, z_feat_dim = 64, 30, 6, 64, 256
    k_traj, k_params = jax.random.split(key)
    traj = jax.random.normal(k_traj, (batch, num_steps, wpt_dim), jnp.float32)
    params = init_params(k_params, num_steps, wpt_dim, hidden_dim, z_feat_dim)

    recon = traj_recon_forward(traj, params, block_rows=16,
                               compute_dtype=jnp.bfloat16)
    recon = jax.block_until_ready(recon)
    ref = _reference_forward(traj, params)
    assert recon.shape == (batch, num_steps, wpt_dim)
    assert jnp.allclose(recon, ref, atol=5e-2, rtol=5e-2)

    print("KERNEL_OK")
</pallas_src>

<mosaic_0001>
module attributes {stable_mosaic.version = 11 : i64} {
  func.func @_traj_recon_kernel(%arg0: i32, %arg1: memref<2x48xf32, #tpu.memory_space<vmem>>, %arg2: memref<48x128xf32, #tpu.memory_space<vmem>>, %arg3: memref<1x128xf32, #tpu.memory_space<vmem>>, %arg4: memref<128x48xf32, #tpu.memory_space<vmem>>, %arg5: memref<1x48xf32, #tpu.memory_space<vmem>>, %arg6: memref<2x48xf32, #tpu.memory_space<vmem>>) attributes {dimension_semantics = [#tpu.dimension_semantics<parallel>], iteration_bounds = array<i64: 1>, scalar_prefetch = 0 : i64, scratch_operands = 0 : i64, tpu.core_type = #tpu.core_type<tc>, window_params = [{transform_indices = @transform_0, window_bounds = array<i64: 2, 48>}, {pipeline_mode = #tpu.pipeline_mode<synchronous>, transform_indices = @transform_1, window_bounds = array<i64: 48, 128>}, {pipeline_mode = #tpu.pipeline_mode<synchronous>, transform_indices = @transform_2, window_bounds = array<i64: 1, 128>}, {pipeline_mode = #tpu.pipeline_mode<synchronous>, transform_indices = @transform_3, window_bounds = array<i64: 128, 48>}, {pipeline_mode = #tpu.pipeline_mode<synchronous>, transform_indices = @transform_4, window_bounds = array<i64: 1, 48>}, {transform_indices = @transform_5, window_bounds = array<i64: 2, 48>}]} {
    %c0 = arith.constant 0 : index
    %c0_0 = arith.constant 0 : index
    %0 = vector.load %arg1[%c0, %c0_0] : memref<2x48xf32, #tpu.memory_space<vmem>>, vector<2x48xf32>
    %c0_1 = arith.constant 0 : index
    %c0_2 = arith.constant 0 : index
    %1 = vector.load %arg2[%c0_1, %c0_2] : memref<48x128xf32, #tpu.memory_space<vmem>>, vector<48x128xf32>
    %cst = arith.constant dense<0.000000e+00> : vector<2x128xf32>
    %2 = tpu.matmul %0, %1, %cst {dimension_numbers = #tpu.dot_dimension_numbers<[1], [0], [0], [1], [0, 0, 1, 1], [], []>} : vector<2x48xf32>, vector<48x128xf32>, vector<2x128xf32> -> vector<2x128xf32>
    %c0_3 = arith.constant 0 : index
    %c0_4 = arith.constant 0 : index
    %3 = vector.load %arg3[%c0_3, %c0_4] : memref<1x128xf32, #tpu.memory_space<vmem>>, vector<1x128xf32>
    %4 = vector.broadcast %3 : vector<1x128xf32> to vector<2x128xf32>
    %5 = arith.addf %2, %4 : vector<2x128xf32>
    %cst_5 = arith.constant 0.000000e+00 : f32
    %6 = vector.broadcast %cst_5 : f32 to vector<2x128xf32>
    %7 = arith.cmpf oge, %5, %6 : vector<2x128xf32>
    %cst_6 = arith.constant 0.00999999977 : f32
    %8 = vector.broadcast %cst_6 : f32 to vector<2x128xf32>
    %9 = arith.mulf %8, %5 : vector<2x128xf32>
    %10 = arith.select %7, %5, %9 : vector<2x128xi1>, vector<2x128xf32>
    %c0_7 = arith.constant 0 : index
    %c0_8 = arith.constant 0 : index
    %11 = vector.load %arg4[%c0_7, %c0_8] : memref<128x48xf32, #tpu.memory_space<vmem>>, vector<128x48xf32>
    %cst_9 = arith.constant dense<0.000000e+00> : vector<2x48xf32>
    %12 = tpu.matmul %10, %11, %cst_9 {dimension_numbers = #tpu.dot_dimension_numbers<[1], [0], [0], [1], [0, 0, 1, 1], [], []>} : vector<2x128xf32>, vector<128x48xf32>, vector<2x48xf32> -> vector<2x48xf32>
    %c0_10 = arith.constant 0 : index
    %c0_11 = arith.constant 0 : index
    %13 = vector.load %arg5[%c0_10, %c0_11] : memref<1x48xf32, #tpu.memory_space<vmem>>, vector<1x48xf32>
    %14 = vector.broadcast %13 : vector<1x48xf32> to vector<2x48xf32>
    %15 = arith.addf %12, %14 : vector<2x48xf32>
    %c0_12 = arith.constant 0 : index
    %c0_13 = arith.constant 0 : index
    %16 = vector.load %arg6[%c0_12, %c0_13] : memref<2x48xf32, #tpu.memory_space<vmem>>, vector<2x48xf32>
    tpu.vector_store %arg6[%c0_12, %c0_13], %15 {strides = array<i32>} : memref<2x48xf32, #tpu.memory_space<vmem>>, vector<2x48xf32>,
    return
  }
  func.func @transform_0(%arg0: i32) -> (i32, i32) {
    %c0_i32 = arith.constant 0 : i32
    %c0_i32_0 = arith.constant 0 : i32
    return %arg0, %c0_i32 : i32, i32
  }
  func.func @transform_1(%arg0: i32) -> (i32, i32) {
    %c0_i32 = arith.constant 0 : i32
    %c0_i32_0 = arith.constant 0 : i32
    %c0_i32_1 = arith.constant 0 : i32
    return %c0_i32, %c0_i32_0 : i32, i32
  }
  func.func @transform_2(%arg0: i32) -> (i32, i32) {
    %c0_i32 = arith.constant 0 : i32
    %c0_i32_0 = arith.constant 0 : i32
    %c0_i32_1 = arith.constant 0 : i32
    return %c0_i32, %c0_i32_0 : i32, i32
  }
  func.func @transform_3(%arg0: i32) -> (i32, i32) {
    %c0_i32 = arith.constant 0 : i32
    %c0_i32_0 = arith.constant 0 : i32
    %c0_i32_1 = arith.constant 0 : i32
    return %c0_i32, %c0_i32_0 : i32, i32
  }
  func.func @transform_4(%arg0: i32) -> (i32, i32) {
    %c0_i32 = arith.constant 0 : i32
    %c0_i32_0 = arith.constant 0 : i32
    %c0_i32_1 = arith.constant 0 : i32
    return %c0_i32, %c0_i32_0 : i32, i32
  }
  func.func @transform_5(%arg0: i32) -> (i32, i32) {
    %c0_i32 = arith.constant 0 : i32
    %c0_i32_0 = arith.constant 0 : i32
    return %arg0, %c0_i32 : i32, i32
  }
}

</mosaic_0001>

<llo_original>
// kernel: tpu_custom_call.1
$region0: #{tpu_custom_call.1}
  #allocation0 [shape = 'u32[]', space=smem, size = 0x4, offset = 0x4, fixed_abs, tag = 'smem constant byte address 0x4 - core index']
  #allocation1 [shape = 'u32[144,128]{1,0:T(1,128)}', space=vmem, size = 0x12000, scoped, tag = 'internal scratch']
  %s0 = inlined_call_operand.vmem [shape: f32[2,48], index: 0, kind: input, shape index: {}]
  %s1 = inlined_call_operand.vmem [shape: f32[48,128], index: 1, kind: input, shape index: {}]
  %s2 = inlined_call_operand.vmem [shape: f32[1,128], index: 2, kind: input, shape index: {}]
  %s3 = inlined_call_operand.vmem [shape: f32[128,48], index: 3, kind: input, shape index: {}]
  %s4 = inlined_call_operand.vmem [shape: f32[1,48], index: 4, kind: input, shape index: {}]
  %s5 = inlined_call_operand.hbm [shape: f32[2,48], index: 5, kind: output, shape index: {}]
  %s6 = sld [smem:[#allocation0]]
  $region30: #{tpu_custom_call.1} parent=0
    _
  %s8 = ssub.s32 1, %s6
  %s9 = scalar_select 0, %s8, %s6
  $region1: #{tpu_custom_call.1} parent=0
    #allocation2 [shape = 'u8[1024]{0}', space=vmem, size = 0x400, scoped, tag = 'output window, operand 0, single buffered']
    #allocation3 [shape = 's32[1]{0}', space=sflag, size = 0x4, scoped, tag = 'scoped memory for tpu_custom_call.1']
    %10 = vsyncpa [#allocation3], 0
    // Predicated region
    $region2: #{tpu_custom_call.1} parent=1 // pred_check
      _
    $region3: #{tpu_custom_call.1} parent=1 // pred_check_branch
      %12 = sbr.rel (0) target = $region5
    $region4: #{tpu_custom_call.1} parent=1 // pred_region
      _
    $region5: #{tpu_custom_call.1} parent=1 // pred_fallthru
      _
    // Predicated region
    $region6: #{tpu_custom_call.1} parent=1 // pred_check
      _
    $region7: #{tpu_custom_call.1} parent=1 // pred_check_branch
      %14 = sbr.rel (0) target = $region9
    $region8: #{tpu_custom_call.1} parent=1 // pred_region
      _
    $region9: #{tpu_custom_call.1} parent=1 // pred_fallthru
      _
    // Predicated region
    $region10: #{tpu_custom_call.1} parent=1 // pred_check
      _
    $region11: #{tpu_custom_call.1} parent=1 // pred_check_branch
      %16 = sbr.rel (0) target = $region13
    $region12: #{tpu_custom_call.1} parent=1 // pred_region
      _
    $region13: #{tpu_custom_call.1} parent=1 // pred_fallthru
      _
    // Predicated region
    $region14: #{tpu_custom_call.1} parent=1 // pred_check
      _
    $region15: #{tpu_custom_call.1} parent=1 // pred_check_branch
      %18 = sbr.rel (0) target = $region17
    $region16: #{tpu_custom_call.1} parent=1 // pred_region
      _
    $region17: #{tpu_custom_call.1} parent=1 // pred_fallthru
      _
    // Predicated region
    $region18: #{tpu_custom_call.1} parent=1 // pred_check
      _
    $region19: #{tpu_custom_call.1} parent=1 // pred_check_branch
      %20 = sbr.rel (0) target = $region21
    $region20: #{tpu_custom_call.1} parent=1 // pred_region
      _
    $region21: #{tpu_custom_call.1} parent=1 // pred_fallthru
      _
    %v21 = vld [vmem:[%s0] sm:$0x3]
    %v22 = vld [vmem:[%s1] sm:$0xff]
    %v23 = vld [vmem:[%s1 + $0x8] sm:$0xff]
    %v24 = vld [vmem:[%s1 + $0x10] sm:$0xff]
    %v25 = vld [vmem:[%s1 + $0x18] sm:$0xff]
    %v26 = vld [vmem:[%s1 + $0x20] sm:$0xff]
    %v27 = vld [vmem:[%s1 + $0x28] sm:$0xff]
    %v28 = vld [vmem:[%s2] sm:$0x1]
    %v30 = vlaneseq
    %v31 = vshrl.u32 %v30, 7
    %v32 = vsub.s32 0, %v31
    %v33 = vrot.slane %v28, %v32
    %vm35 = vcmask 392192
    %v37 = vsel %vm35, %v21, 0
    %39 = vmatprep.subr.mxu0 0.0
    %40 = vmatpush1.msra.mxu0 %v22
    %41 = vmatprep.subr.mxu0 0.0
    %42 = vmatpush1.msra.mxu0 %v23
    %43 = vmatprep.subr.mxu0 0.0
    %44 = vmatpush1.msra.mxu0 %v24
    %45 = vmatprep.subr.mxu0 0.0
    %46 = vmatpush1.msra.mxu0 %v25
    %47 = vmatprep.subr.mxu0 0.0
    %48 = vmatpush1.msra.mxu0 %v26
    %49 = vmatprep.subr.mxu0 0.0
    %50 = vmatpush1.msra.mxu0 %v27
    %51 = vmatprep.subr.mxu0 0.0
    %52 = vmatpush1.msra.mxu0 0.0
    %53 = vmatprep.subr.mxu0 0.0
    %54 = vmatpush1.msra.mxu0 0.0
    %55 = vmatprep.subr.mxu0 0.0
    %56 = vmatpush1.msra.mxu0 0.0
    %57 = vmatprep.subr.mxu0 0.0
    %58 = vmatpush1.msra.mxu0 0.0
    %59 = vmatprep.subr.mxu0 0.0
    %60 = vmatpush1.msra.mxu0 0.0
    %61 = vmatprep.subr.mxu0 0.0
    %62 = vmatpush1.msra.mxu0 0.0
    %63 = vmatprep.subr.mxu0 0.0
    %64 = vmatpush1.msra.mxu0 0.0
    %65 = vmatprep.subr.mxu0 0.0
    %66 = vmatpush1.msra.mxu0 0.0
    %67 = vmatprep.subr.mxu0 0.0
    %68 = vmatpush1.msra.mxu0 0.0
    %69 = vmatprep.subr.mxu0 0.0
    %70 = vmatpush1.msra.mxu0 0.0
    %71 = vmatprep.subr.mxu0 0.0
    %72 = vmatpush1.msra.mxu0 0.0
    %73 = vmatprep.subr.mxu0 0.0
    %74 = vmatpush1.msra.mxu0 0.0
    %75 = vmatprep.subr.mxu0 0.0
    %76 = vmatpush1.msra.mxu0 0.0
    %77 = vmatprep.subr.mxu0 0.0
    %78 = vmatpush1.msra.mxu0 0.0
    %79 = vmatprep.subr.mxu0 0.0
    %80 = vmatpush1.msra.mxu0 0.0
    %81 = vmatprep.subr.mxu0 0.0
    %82 = vmatpush1.msra.mxu0 0.0
    %83 = vmatprep.subr.mxu0 0.0
    %84 = vmatpush1.msra.mxu0 0.0
    %85 = vmatprep.subr.mxu0 0.0
    %86 = vmatpush1.msra.mxu0 0.0
    %87 = vmatprep.subr.mxu0 0.0
    %88 = vmatpush1.msra.mxu0 0.0
    %89 = vmatprep.subr.mxu0 0.0
    %90 = vmatpush1.msra.mxu0 0.0
    %91 = vmatprep.subr.mxu0 0.0
    %92 = vmatpush1.msra.mxu0 0.0
    %93 = vmatprep.subr.mxu0 0.0
    %94 = vmatpush1.msra.mxu0 0.0
    %95 = vmatprep.subr.mxu0 0.0
    %96 = vmatpush1.msra.mxu0 0.0
    %97 = vmatprep.subr.mxu0 0.0
    %98 = vmatpush1.msra.mxu0 0.0
    %99 = vmatprep.subr.mxu0 0.0
    %100 = vmatpush1.msra.mxu0 0.0
    %101 = vmatprep.subr.mxu0 0.0
    %102 = vmatpush1.msra.mxu0 0.0
    %103 = vmatprep.mubr.f32.mxu0 0.0
    %104 = vmatmul.mubr.f32.gmra.mrb[0].mxu0 %v37
    %v105 = vpop.f32.mrb[0].mxu0
    %v106 = vadd.f32 %v33, %v105
    %v107 = vpop.f32.mrb[0].mxu0
    %108 = vdwg.mxu0
    %vm109 = vcmp.ge.f32.partialorder %v106, 0.0
    %v110 = vmul.f32 %v106, 0.01
    %v111 = vsel %vm109, %v106, %v110
    %v112 = vld [vmem:[%s3] sm:$0xff]
    %v113 = vld [vmem:[%s3 + $0x8] sm:$0xff]
    %v114 = vld [vmem:[%s3 + $0x10] sm:$0xff]
    %v115 = vld [vmem:[%s3 + $0x18] sm:$0xff]
    %v116 = vld [vmem:[%s3 + $0x20] sm:$0xff]
    %v117 = vld [vmem:[%s3 + $0x28] sm:$0xff]
    %v118 = vld [vmem:[%s3 + $0x30] sm:$0xff]
    %v119 = vld [vmem:[%s3 + $0x38] sm:$0xff]
    %v120 = vld [vmem:[%s3 + $0x40] sm:$0xff]
    %v121 = vld [vmem:[%s3 + $0x48] sm:$0xff]
    %v122 = vld [vmem:[%s3 + $0x50] sm:$0xff]
    %v123 = vld [vmem:[%s3 + $0x58] sm:$0xff]
    %v124 = vld [vmem:[%s3 + $0x60] sm:$0xff]
    %v125 = vld [vmem:[%s3 + $0x68] sm:$0xff]
    %v126 = vld [vmem:[%s3 + $0x70] sm:$0xff]
    %v127 = vld [vmem:[%s3 + $0x78] sm:$0xff]
    %v128 = vld [vmem:[%s4] sm:$0x1]
    %v130 = vlaneseq
    %v131 = vshrl.u32 %v130, 7
    %v132 = vsub.s32 0, %v131
    %v133 = vrot.slane %v128, %v132
    %135 = vmatprep.subr.mxu0 0.0
    %136 = vmatpush1.msra.mxu0 %v112
    %137 = vmatprep.subr.mxu0 0.0
    %138 = vmatpush1.msra.mxu0 %v113
    %139 = vmatprep.subr.mxu0 0.0
    %140 = vmatpush1.msra.mxu0 %v114
    %141 = vmatprep.subr.mxu0 0.0
    %142 = vmatpush1.msra.mxu0 %v115
    %143 = vmatprep.subr.mxu0 0.0
    %144 = vmatpush1.msra.mxu0 %v116
    %145 = vmatprep.subr.mxu0 0.0
    %146 = vmatpush1.msra.mxu0 %v117
    %147 = vmatprep.subr.mxu0 0.0
    %148 = vmatpush1.msra.mxu0 %v118
    %149 = vmatprep.subr.mxu0 0.0
    %150 = vmatpush1.msra.mxu0 %v119
    %151 = vmatprep.subr.mxu0 0.0
    %152 = vmatpush1.msra.mxu0 %v120
    %153 = vmatprep.subr.mxu0 0.0
    %154 = vmatpush1.msra.mxu0 %v121
    %155 = vmatprep.subr.mxu0 0.0
    %156 = vmatpush1.msra.mxu0 %v122
    %157 = vmatprep.subr.mxu0 0.0
    %158 = vmatpush1.msra.mxu0 %v123
    %159 = vmatprep.subr.mxu0 0.0
    %160 = vmatpush1.msra.mxu0 %v124
    %161 = vmatprep.subr.mxu0 0.0
    %162 = vmatpush1.msra.mxu0 %v125
    %163 = vmatprep.subr.mxu0 0.0
    %164 = vmatpush1.msra.mxu0 %v126
    %165 = vmatprep.subr.mxu0 0.0
    %166 = vmatpush1.msra.mxu0 %v127
    %167 = vmatprep.subr.mxu0 0.0
    %168 = vmatpush1.msra.mxu0 0.0
    %169 = vmatprep.subr.mxu0 0.0
    %170 = vmatpush1.msra.mxu0 0.0
    %171 = vmatprep.subr.mxu0 0.0
    %172 = vmatpush1.msra.mxu0 0.0
    %173 = vmatprep.subr.mxu0 0.0
    %174 = vmatpush1.msra.mxu0 0.0
    %175 = vmatprep.subr.mxu0 0.0
    %176 = vmatpush1.msra.mxu0 0.0
    %177 = vmatprep.subr.mxu0 0.0
    %178 = vmatpush1.msra.mxu0 0.0
    %179 = vmatprep.subr.mxu0 0.0
    %180 = vmatpush1.msra.mxu0 0.0
    %181 = vmatprep.subr.mxu0 0.0
    %182 = vmatpush1.msra.mxu0 0.0
    %183 = vmatprep.subr.mxu0 0.0
    %184 = vmatpush1.msra.mxu0 0.0
    %185 = vmatprep.subr.mxu0 0.0
    %186 = vmatpush1.msra.mxu0 0.0
    %187 = vmatprep.subr.mxu0 0.0
    %188 = vmatpush1.msra.mxu0 0.0
    %189 = vmatprep.subr.mxu0 0.0
    %190 = vmatpush1.msra.mxu0 0.0
    %191 = vmatprep.subr.mxu0 0.0
    %192 = vmatpush1.msra.mxu0 0.0
    %193 = vmatprep.subr.mxu0 0.0
    %194 = vmatpush1.msra.mxu0 0.0
    %195 = vmatprep.subr.mxu0 0.0
    %196 = vmatpush1.msra.mxu0 0.0
    %197 = vmatprep.subr.mxu0 0.0
    %198 = vmatpush1.msra.mxu0 0.0
    %199 = vmatprep.mubr.f32.mxu0 0.0
    %200 = vmatmul.mubr.f32.gmra.mrb[0].mxu0 %v111
    %v201 = vpop.f32.mrb[0].mxu0
    %v202 = vadd.f32 %v133, %v201
    %v203 = vpop.f32.mrb[0].mxu0
    %204 = vdwg.mxu0
    %vm205 = vcmask 386048
    %206 = vst.msk [vmem:[#allocation2] sm:$0x3] %vm205, %v202
    // Predicated region
    $region22: #{tpu_custom_call.1} parent=1 // pred_check
      _
    $region23: #{tpu_custom_call.1} parent=1 // pred_check_branch
      %208 = sbr.rel (0) target = $region25
    $region24: #{tpu_custom_call.1} parent=1 // pred_region
      %s210 = ssub.s32 32, 32
      %211 = vsyncadd [#allocation3], %s210
      %s213 = sshll.u32 [#allocation2], 4
      %s214 = int_to_ptr.vmem [resolvable:$true] %s213
      %216 = dma.vmem_to_hbm [thread:$0]  %s214, 32, %s5, [#allocation3]
    $region25: #{tpu_custom_call.1} parent=1 // pred_fallthru
      _
    // Predicated region
    $region26: #{tpu_custom_call.1} parent=1 // pred_check
      _
    $region27: #{tpu_custom_call.1} parent=1 // pred_check_branch
      %218 = sbr.rel (0) target = $region29
    $region28: #{tpu_custom_call.1} parent=1 // pred_region
      %219 = dma.done [#allocation3], 32
    $region29: #{tpu_custom_call.1} parent=1 // pred_fallthru
      _
    %220 = vsyncpa [#allocation3], 1

</llo_original>
